<compile_context>
chip_gen: v7x
topology: tpu7x:2x2x1
jax: 0.10.0
libtpu: 0.0.40
codegen_flags: <defaults>
</compile_context>

<pallas_src>
import jax
import jax.numpy as jnp
from jax.experimental import pallas as pl
from jax.experimental.pallas import tpu as pltpu


def _mlp_kernel(params_ref, x_ref, out_ref):
    """One batch tile (batch dense on sublanes and lanes).

    params_ref : SMEM (9,) f32 = [w1_00, w1_01, w1_10, w1_11,
                                  b1_0, b1_1, w2_0, w2_1, b2_0]
    x_ref      : VMEM (n_in=2, TS, 128)  -- TS*128 samples per tile
    out_ref    : VMEM (TS, 128)
    """
    x0 = x_ref[0]                 # (TS, 128) -- feature 0 for every sample
    x1 = x_ref[1]                 # (TS, 128) -- feature 1 for every sample

    w1_00 = params_ref[0]
    w1_01 = params_ref[1]
    w1_10 = params_ref[2]
    w1_11 = params_ref[3]
    b1_0 = params_ref[4]
    b1_1 = params_ref[5]
    w2_0 = params_ref[6]
    w2_1 = params_ref[7]
    b2_0 = params_ref[8]

    # Hidden layer: K=2 contraction as VPU broadcast FMAs (an MXU pass would
    # be <2% utilized).  sigmoid(z) = 0.5*tanh(0.5*z) + 0.5 -> one EUP op per
    # hidden unit, exact (no approx reciprocal).
    h0 = 0.5 * jnp.tanh(0.5 * (w1_00 * x0 + w1_01 * x1 + b1_0)) + 0.5
    h1 = 0.5 * jnp.tanh(0.5 * (w1_10 * x0 + w1_11 * x1 + b1_1)) + 0.5

    # Output layer (n_out = 1): two more FMAs, full (8,128)-dense store.
    out_ref[...] = w2_0 * h0 + w2_1 * h1 + b2_0


def net_forward(x, w1, b1, w2, b2, *, tb_samples=None, force_kernel=False):
    """Forward pass of Net.

    x : (B, 2) f32.  w1: (2, 2), b1: (2,), w2: (1, 2), b2: (1,)
    (PyTorch nn.Linear convention: weight is (out_features, in_features)).
    Returns (B, 1) f32.
    """
    x = jnp.asarray(x, jnp.float32)
    w1 = jnp.asarray(w1, jnp.float32)
    b1 = jnp.asarray(b1, jnp.float32)
    w2 = jnp.asarray(w2, jnp.float32)
    b2 = jnp.asarray(b2, jnp.float32)

    B, n_in = x.shape
    n_hid = w1.shape[0]
    n_out = w2.shape[0]
    # The kernel is specialized to the module's sizes.
    assert n_in == 2 and n_hid == 2 and n_out == 1

    # Tiny-batch fast path: launch/pad overhead would dominate the kernel.
    if not force_kernel and B <= 2048:
        hid = jax.nn.sigmoid(x @ w1.T + b1)
        return hid @ w2.T + b2

    # ---- tile-size selection -------------------------------------------------
    GRANULE = 8 * 128              # 1024 samples = one full (8,128) vreg/tile
    TB_MAX = 512 * 1024            # samples/step: ~4 MiB in, ~12 MiB VMEM 2-buf

    b_g = pl.cdiv(B, GRANULE)      # batch measured in 1024-sample granules
    if tb_samples is not None:
        tb_g = max(1, tb_samples // GRANULE)
    else:
        # >= 8 tiles when the batch allows it (megacore sharding on v7x +
        # pipelining) while keeping each tile <= TB_MAX samples.
        tiles = max(1, min(b_g, max(8, pl.cdiv(b_g * GRANULE, TB_MAX))))
        tb_g = pl.cdiv(b_g, tiles)
    num_tiles = pl.cdiv(b_g, tb_g)
    tb = tb_g * GRANULE            # samples per grid step (multiple of 1024)
    b_pad = num_tiles * tb
    ts = tb // 128                 # sublane rows per tile (multiple of 8)

    # ---- layout: batch dense on sublanes AND lanes ---------------------------
    # Single fused pad of the feature-major view, then a free contiguous
    # reshape onto (n_in, rows, 128).
    x_t = jnp.pad(x.T, ((0, 0), (0, b_pad - B))).reshape(n_in, b_pad // 128, 128)

    # All 9 scalar parameters in one SMEM array.
    params = jnp.concatenate(
        [w1.reshape(-1), b1.reshape(-1), w2.reshape(-1), b2.reshape(-1)]
    )  # (9,)

    out_t = pl.pallas_call(
        _mlp_kernel,
        out_shape=jax.ShapeDtypeStruct((b_pad // 128, 128), jnp.float32),
        grid_spec=pltpu.PrefetchScalarGridSpec(
            num_scalar_prefetch=0,
            grid=(num_tiles,),
            in_specs=[
                pl.BlockSpec(memory_space=pltpu.MemorySpace.SMEM),   # params
                pl.BlockSpec((n_in, ts, 128), lambda i: (0, i, 0)),  # x tile
            ],
            out_specs=pl.BlockSpec((ts, 128), lambda i: (i, 0)),
        ),
        compiler_params=pltpu.CompilerParams(
            dimension_semantics=("parallel",),
            vmem_limit_bytes=32 * 1024 * 1024,
        ),
    )(params, x_t)

    # Back to (B, n_out); padded samples are discarded here.
    return out_t.reshape(b_pad)[:B].reshape(B, n_out)


def _reference(x, w1, b1, w2, b2):
    hid = jax.nn.sigmoid(x @ w1.T + b1)
    return hid @ w2.T + b2


if __name__ == "__main__":
    # Module-implied sizes: in_features = 2, nhiddens = 2, out_features = 1.
    n_in, n_hid, n_out = 2, 2, 1

    key = jax.random.PRNGKey(0)
    k1, k2, k3, k4, kx = jax.random.split(key, 5)

    # Deterministic synthetic parameters (PyTorch nn.Linear shapes).
    w1 = jax.random.normal(k1, (n_hid, n_in), dtype=jnp.float32) * 0.5
    b1 = jax.random.normal(k2, (n_hid,), dtype=jnp.float32) * 0.1
    w2 = jax.random.normal(k3, (n_out, n_hid), dtype=jnp.float32) * 0.5
    b2 = jax.random.normal(k4, (n_out,), dtype=jnp.float32) * 0.1

    # 1) The XOR truth-table inputs from the original module (batch = 4),
    #    forced through the Pallas kernel (single 1024-sample tile).
    x_small = jnp.array([[0., 0.], [0., 1.], [1., 0.], [1., 1.]],
                        dtype=jnp.float32)
    out_small = net_forward(x_small, w1, b1, w2, b2, force_kernel=True)
    jax.block_until_ready(out_small)
    ref_small = _reference(x_small, w1, b1, w2, b2)
    assert out_small.shape == (4, n_out)
    assert jnp.allclose(out_small, ref_small, atol=1e-4), "mismatch vs reference"

    # 1b) Same inputs through the tiny-batch fast path.
    out_fast = net_forward(x_small, w1, b1, w2, b2)
    jax.block_until_ready(out_fast)
    assert jnp.allclose(out_fast, ref_small, atol=1e-5), "fast-path mismatch"

    # 2) A ragged larger batch with a small tile override to exercise the grid,
    #    pipelining, and the padding/slicing path (grid = 5, last tile padded).
    x_big = jax.random.uniform(kx, (4100, n_in), dtype=jnp.float32)
    out_big = net_forward(x_big, w1, b1, w2, b2, tb_samples=1024,
                          force_kernel=True)
    jax.block_until_ready(out_big)
    ref_big = _reference(x_big, w1, b1, w2, b2)
    assert out_big.shape == (4100, n_out)
    assert jnp.allclose(out_big, ref_big, atol=1e-4), "mismatch vs reference (gridded)"

    print("KERNEL_OK")
</pallas_src>

<mosaic_0001>
module attributes {stable_mosaic.version = 11 : i64} {
  func.func @_mlp_kernel(%arg0: i32, %arg1: memref<9xf32, #tpu.memory_space<smem>>, %arg2: memref<2x8x128xf32, #tpu.memory_space<vmem>>, %arg3: memref<8x128xf32, #tpu.memory_space<vmem>>) attributes {dimension_semantics = [#tpu.dimension_semantics<parallel>], iteration_bounds = array<i64: 1>, scalar_prefetch = 0 : i64, scratch_operands = 0 : i64, tpu.core_type = #tpu.core_type<tc>, window_params = [{transform_indices = @transform_0, window_bounds = array<i64: 9>}, {transform_indices = @transform_1, window_bounds = array<i64: 2, 8, 128>}, {transform_indices = @transform_2, window_bounds = array<i64: 8, 128>}]} {
    %c0 = arith.constant 0 : index
    %c0_0 = arith.constant 0 : index
    %c0_1 = arith.constant 0 : index
    %0 = vector.load %arg2[%c0, %c0_0, %c0_1] : memref<2x8x128xf32, #tpu.memory_space<vmem>>, vector<1x8x128xf32>
    %1 = vector.shape_cast %0 : vector<1x8x128xf32> to vector<8x128xf32>
    %c1 = arith.constant 1 : index
    %c0_2 = arith.constant 0 : index
    %c0_3 = arith.constant 0 : index
    %2 = vector.load %arg2[%c1, %c0_2, %c0_3] : memref<2x8x128xf32, #tpu.memory_space<vmem>>, vector<1x8x128xf32>
    %3 = vector.shape_cast %2 : vector<1x8x128xf32> to vector<8x128xf32>
    %c0_4 = arith.constant 0 : index
    %4 = memref.load %arg1[%c0_4] : memref<9xf32, #tpu.memory_space<smem>>
    %c1_5 = arith.constant 1 : index
    %5 = memref.load %arg1[%c1_5] : memref<9xf32, #tpu.memory_space<smem>>
    %c2 = arith.constant 2 : index
    %6 = memref.load %arg1[%c2] : memref<9xf32, #tpu.memory_space<smem>>
    %c3 = arith.constant 3 : index
    %7 = memref.load %arg1[%c3] : memref<9xf32, #tpu.memory_space<smem>>
    %c4 = arith.constant 4 : index
    %8 = memref.load %arg1[%c4] : memref<9xf32, #tpu.memory_space<smem>>
    %c5 = arith.constant 5 : index
    %9 = memref.load %arg1[%c5] : memref<9xf32, #tpu.memory_space<smem>>
    %c6 = arith.constant 6 : index
    %10 = memref.load %arg1[%c6] : memref<9xf32, #tpu.memory_space<smem>>
    %c7 = arith.constant 7 : index
    %11 = memref.load %arg1[%c7] : memref<9xf32, #tpu.memory_space<smem>>
    %c8 = arith.constant 8 : index
    %12 = memref.load %arg1[%c8] : memref<9xf32, #tpu.memory_space<smem>>
    %13 = vector.broadcast %4 : f32 to vector<8x128xf32>
    %14 = arith.mulf %13, %1 : vector<8x128xf32>
    %15 = vector.broadcast %5 : f32 to vector<8x128xf32>
    %16 = arith.mulf %15, %3 : vector<8x128xf32>
    %17 = arith.addf %14, %16 : vector<8x128xf32>
    %18 = vector.broadcast %8 : f32 to vector<8x128xf32>
    %19 = arith.addf %17, %18 : vector<8x128xf32>
    %cst = arith.constant 5.000000e-01 : f32
    %20 = vector.broadcast %cst : f32 to vector<8x128xf32>
    %21 = arith.mulf %20, %19 : vector<8x128xf32>
    %22 = math.tanh %21 : vector<8x128xf32>
    %cst_6 = arith.constant 5.000000e-01 : f32
    %23 = vector.broadcast %cst_6 : f32 to vector<8x128xf32>
    %24 = arith.mulf %23, %22 : vector<8x128xf32>
    %cst_7 = arith.constant 5.000000e-01 : f32
    %25 = vector.broadcast %cst_7 : f32 to vector<8x128xf32>
    %26 = arith.addf %24, %25 : vector<8x128xf32>
    %27 = vector.broadcast %6 : f32 to vector<8x128xf32>
    %28 = arith.mulf %27, %1 : vector<8x128xf32>
    %29 = vector.broadcast %7 : f32 to vector<8x128xf32>
    %30 = arith.mulf %29, %3 : vector<8x128xf32>
    %31 = arith.addf %28, %30 : vector<8x128xf32>
    %32 = vector.broadcast %9 : f32 to vector<8x128xf32>
    %33 = arith.addf %31, %32 : vector<8x128xf32>
    %cst_8 = arith.constant 5.000000e-01 : f32
    %34 = vector.broadcast %cst_8 : f32 to vector<8x128xf32>
    %35 = arith.mulf %34, %33 : vector<8x128xf32>
    %36 = math.tanh %35 : vector<8x128xf32>
    %cst_9 = arith.constant 5.000000e-01 : f32
    %37 = vector.broadcast %cst_9 : f32 to vector<8x128xf32>
    %38 = arith.mulf %37, %36 : vector<8x128xf32>
    %cst_10 = arith.constant 5.000000e-01 : f32
    %39 = vector.broadcast %cst_10 : f32 to vector<8x128xf32>
    %40 = arith.addf %38, %39 : vector<8x128xf32>
    %41 = vector.broadcast %10 : f32 to vector<8x128xf32>
    %42 = arith.mulf %41, %26 : vector<8x128xf32>
    %43 = vector.broadcast %11 : f32 to vector<8x128xf32>
    %44 = arith.mulf %43, %40 : vector<8x128xf32>
    %45 = arith.addf %42, %44 : vector<8x128xf32>
    %46 = vector.broadcast %12 : f32 to vector<8x128xf32>
    %47 = arith.addf %45, %46 : vector<8x128xf32>
    %c0_11 = arith.constant 0 : index
    %c0_12 = arith.constant 0 : index
    %48 = vector.load %arg3[%c0_11, %c0_12] : memref<8x128xf32, #tpu.memory_space<vmem>>, vector<8x128xf32>
    tpu.vector_store %arg3[%c0_11, %c0_12], %47 {strides = array<i32>} : memref<8x128xf32, #tpu.memory_space<vmem>>, vector<8x128xf32>,
    return
  }
  func.func @transform_0(%arg0: i32) -> i32 {
    %c0_i32 = arith.constant 0 : i32
    %c0_i32_0 = arith.constant 0 : i32
    return %c0_i32 : i32
  }
  func.func @transform_1(%arg0: i32) -> (i32, i32, i32) {
    %c0_i32 = arith.constant 0 : i32
    %c0_i32_0 = arith.constant 0 : i32
    %c0_i32_1 = arith.constant 0 : i32
    return %c0_i32, %arg0, %c0_i32_0 : i32, i32, i32
  }
  func.func @transform_2(%arg0: i32) -> (i32, i32) {
    %c0_i32 = arith.constant 0 : i32
    %c0_i32_0 = arith.constant 0 : i32
    return %arg0, %c0_i32 : i32, i32
  }
}

</mosaic_0001>

<llo_original>
// kernel: tpu_custom_call.1
$region0: #{tpu_custom_call.1}
  #allocation0 [shape = 'u32[]', space=smem, size = 0x4, offset = 0x4, fixed_abs, tag = 'smem constant byte address 0x4 - core index']
  #allocation1 [shape = 'u32[144,128]{1,0:T(1,128)}', space=vmem, size = 0x12000, scoped, tag = 'internal scratch']
  %s0 = inlined_call_operand.hbm [shape: f32[9], index: 0, kind: input, shape index: {}]
  %s1 = inlined_call_operand.hbm [shape: f32[2,8,128], index: 1, kind: input, shape index: {}]
  %s2 = inlined_call_operand.hbm [shape: f32[8,128], index: 2, kind: output, shape index: {}]
  %s3 = sld [smem:[#allocation0]]
  $region26: #{tpu_custom_call.1} parent=0
    _
  %s5 = ssub.s32 1, %s3
  %s6 = scalar_select 0, %s5, %s3
  $region1: #{tpu_custom_call.1} parent=0
    #allocation2 [shape = 'u8[512]{0}', space=smem, size = 0x200, scoped, tag = 'input window, operand 0, single buffered']
    #allocation3 [shape = 's32[1]{0}', space=sflag, size = 0x4, scoped, tag = 'scoped memory for tpu_custom_call.1']
    #allocation4 [shape = 's32[1]{0}', space=sflag, size = 0x4, scoped, tag = 'scoped memory for tpu_custom_call.1']
    #allocation5 [shape = 's32[1]{0}', space=sflag, size = 0x4, scoped, tag = 'scoped memory for tpu_custom_call.1']
    #allocation6 [shape = 'u8[8192]{0}', space=vmem, size = 0x2000, scoped, tag = 'input window, operand 1, single buffered']
    #allocation7 [shape = 'u8[4096]{0}', space=vmem, size = 0x1000, scoped, tag = 'output window, operand 0, single buffered']
    %7 = vsyncpa [#allocation5], 0
    %8 = vsyncpa [#allocation3], 0
    %9 = vsyncpa [#allocation4], 0
    // Predicated region
    $region2: #{tpu_custom_call.1} parent=1 // pred_check
      _
    $region3: #{tpu_custom_call.1} parent=1 // pred_check_branch
      %11 = sbr.rel (0) target = $region5
    $region4: #{tpu_custom_call.1} parent=1 // pred_region
      %s13 = ssub.s32 16, 16
      %14 = vsyncadd [#allocation5], %s13
      %17 = dma.hbm_to_smem %s0, 16, [#allocation2], [#allocation5]
    $region5: #{tpu_custom_call.1} parent=1 // pred_fallthru
      _
    // Predicated region
    $region6: #{tpu_custom_call.1} parent=1 // pred_check
      _
    $region7: #{tpu_custom_call.1} parent=1 // pred_check_branch
      %19 = sbr.rel (0) target = $region9
    $region8: #{tpu_custom_call.1} parent=1 // pred_region
      %s21 = ssub.s32 256, 256
      %22 = vsyncadd [#allocation3], %s21
      %s23 = sshll.u32 [#allocation6], 4
      %s24 = int_to_ptr.vmem [resolvable:$true] %s23
      %29 = dma.hbm_to_vmem [thread:$0]  %s1, 256, %s24, [#allocation3], 128, 128, 8
    $region9: #{tpu_custom_call.1} parent=1 // pred_fallthru
      _
    // Predicated region
    $region10: #{tpu_custom_call.1} parent=1 // pred_check
      _
    $region11: #{tpu_custom_call.1} parent=1 // pred_check_branch
      %31 = sbr.rel (0) target = $region13
    $region12: #{tpu_custom_call.1} parent=1 // pred_region
      %32 = dma.done [#allocation5], 16
    $region13: #{tpu_custom_call.1} parent=1 // pred_fallthru
      _
    // Predicated region
    $region14: #{tpu_custom_call.1} parent=1 // pred_check
      _
    $region15: #{tpu_custom_call.1} parent=1 // pred_check_branch
      %34 = sbr.rel (0) target = $region17
    $region16: #{tpu_custom_call.1} parent=1 // pred_region
      %35 = dma.done [#allocation3], 256
    $region17: #{tpu_custom_call.1} parent=1 // pred_fallthru
      _
    %36 = sfence
    %v37 = vld [vmem:[#allocation6] sm:$0xff]
    %s38 = scalar_lea.vmem [#allocation6], 8
    %v39 = vld [vmem:[%s38] sm:$0xff]
    %s40 = sld [smem:[#allocation2]]
    %s41 = sld [smem:[#allocation2 + $0x1]]
    %s42 = sld [smem:[#allocation2 + $0x2]]
    %s43 = sld [smem:[#allocation2 + $0x3]]
    %s44 = sld [smem:[#allocation2 + $0x4]]
    %s45 = sld [smem:[#allocation2 + $0x5]]
    %s46 = sld [smem:[#allocation2 + $0x6]]
    %s47 = sld [smem:[#allocation2 + $0x7]]
    %s48 = sld [smem:[#allocation2 + $0x8]]
    %v49 = vstv %s40
    %v50 = vmul.f32 %v49, %v37
    %v51 = vstv %s41
    %v52 = vmul.f32 %v51, %v39
    %v53 = vadd.f32 %v50, %v52
    %v54 = vstv %s44
    %v55 = vadd.f32 %v53, %v54
    %v56 = vmul.f32 %v55, 0.5
    %v57 = vtanh.pop %v56
    %v58 = vmul.f32 %v57, 0.5
    %v59 = vadd.f32 %v58, 0.5
    %v60 = vstv %s42
    %v61 = vmul.f32 %v60, %v37
    %v62 = vstv %s43
    %v63 = vmul.f32 %v62, %v39
    %v64 = vadd.f32 %v61, %v63
    %v65 = vstv %s45
    %v66 = vadd.f32 %v64, %v65
    %v67 = vmul.f32 %v66, 0.5
    %v68 = vtanh.pop %v67
    %v69 = vmul.f32 %v68, 0.5
    %v70 = vadd.f32 %v69, 0.5
    %v71 = vstv %s46
    %v72 = vmul.f32 %v71, %v59
    %v73 = vstv %s47
    %v74 = vmul.f32 %v73, %v70
    %v75 = vadd.f32 %v72, %v74
    %v76 = vstv %s48
    %v77 = vadd.f32 %v75, %v76
    %78 = vst [vmem:[#allocation7] sm:$0xff] %v77
    // Predicated region
    $region18: #{tpu_custom_call.1} parent=1 // pred_check
      _
    $region19: #{tpu_custom_call.1} parent=1 // pred_check_branch
      %80 = sbr.rel (0) target = $region21
    $region20: #{tpu_custom_call.1} parent=1 // pred_region
      %s82 = ssub.s32 128, 128
      %83 = vsyncadd [#allocation4], %s82
      %s85 = sshll.u32 [#allocation7], 4
      %s86 = int_to_ptr.vmem [resolvable:$true] %s85
      %88 = dma.vmem_to_hbm [thread:$0]  %s86, 128, %s2, [#allocation4]
    $region21: #{tpu_custom_call.1} parent=1 // pred_fallthru
      _
    // Predicated region
    $region22: #{tpu_custom_call.1} parent=1 // pred_check
      _
    $region23: #{tpu_custom_call.1} parent=1 // pred_check_branch
      %90 = sbr.rel (0) target = $region25
    $region24: #{tpu_custom_call.1} parent=1 // pred_region
      %91 = dma.done [#allocation4], 128
    $region25: #{tpu_custom_call.1} parent=1 // pred_fallthru
      _
    %92 = vsyncpa [#allocation3], 1
    %93 = vsyncpa [#allocation4], 1
    %94 = vsyncpa [#allocation5], 1

</llo_original>
